<compile_context>
chip_gen: v7x
topology: tpu7x:2x2x1
jax: 0.10.0
libtpu: 0.0.40
codegen_flags: <defaults>
</compile_context>

<pallas_src>
import functools

import jax
import jax.numpy as jnp
from jax.experimental import pallas as pl
from jax.experimental.pallas import tpu as pltpu


def _round_up(x, n):
    return (x + n - 1) // n * n


# -----------------------------------------------------------------------------
# Kernel
# -----------------------------------------------------------------------------
def _filter_gate_kernel(h_ref, m_ref, wh_ref, wm_ref, bm_ref,
                        wua_ref, wub_ref, o_ref, *, d):
    f32 = jnp.float32
    cd = wh_ref.dtype            # MXU compute dtype (bf16)
    d2 = 2 * d

    # In-kernel cast of the tile to bf16 (no wrapper-side materialized cast).
    h = h_ref[...].astype(cd)                                    # (tm, 2D)
    m = m_ref[...].astype(cd)                                    # (tm, 2D)

    # Two wide fused matmuls, f32 accumulation on the MXU:
    #   y_h = h @ [ w_m_[:, :2D].T | w_s_h.T ]            -> (tm, 3D)
    #   y_m = m @ [ w_m.T          | w_m_s.T ] + bias     -> (tm, 3D)
    y_h = jnp.dot(h, wh_ref[...], preferred_element_type=f32)
    y_m = jnp.dot(m, wm_ref[...], preferred_element_type=f32) + bm_ref[...]

    out = y_h[:, :d2]                                   # h @ w_m_[:, :2D].T

    # u = sigmoid([w_s_h(h) | w_m_s(m)]) * tanh(w_m(m)), split at column D so
    # no lane-axis concat is needed (two accumulating K=D matmuls instead).
    u_a = (jax.nn.sigmoid(y_h[:, d2:]) * jnp.tanh(y_m[:, :d])).astype(cd)
    u_b = (jax.nn.sigmoid(y_m[:, d2:]) * jnp.tanh(y_m[:, d:d2])).astype(cd)

    out = out + jnp.dot(u_a, wua_ref[...], preferred_element_type=f32)
    out = out + jnp.dot(u_b, wub_ref[...], preferred_element_type=f32)

    o_ref[...] = out.astype(o_ref.dtype)


# -----------------------------------------------------------------------------
# Parameter packing (hoisted out of the per-call path)
# -----------------------------------------------------------------------------
def prepare_filter_gate_params(params, compute_dtype=jnp.bfloat16):
    """Pack/transpose all weights once."""
    w_s_h = params["w_s_h"]            # (D, 2D)      no bias
    w_m_s, b_m_s = params["w_m_s"]     # (D, 2D), (D,)
    w_m, b_m = params["w_m"]           # (2D, 2D), (2D,)
    w_m_ = params["w_m_"]              # (2D, 4D)     no bias

    d2 = w_s_h.shape[1]                # 2D
    d = d2 // 2

    wh = jnp.concatenate([w_m_[:, :d2].T, w_s_h.T], axis=1)   # (2D, 3D)
    wm = jnp.concatenate([w_m.T, w_m_s.T], axis=1)            # (2D, 3D)
    bm = jnp.concatenate([b_m, b_m_s]).reshape(1, 3 * d)      # (1, 3D)
    wu = w_m_[:, d2:].T                                       # (2D, 2D)

    return {
        "wh": wh.astype(compute_dtype),
        "wm": wm.astype(compute_dtype),
        "bm": bm.astype(jnp.float32),       # bias added after f32 accumulation
        "wu_a": wu[:d].astype(compute_dtype),   # multiplies u[:, :D]
        "wu_b": wu[d:].astype(compute_dtype),   # multiplies u[:, D:2D]
    }


# -----------------------------------------------------------------------------
# Tiling / VMEM budget heuristics
# -----------------------------------------------------------------------------
def _choose_tm(n_rows, d, tm):
    """Row-tile size: big enough to amortize per-step overhead, small enough
    to give v7x's two TensorCores at least 2 grid steps when rows permit."""
    if tm is None:
        if d <= 256:
            tm = 1024
        elif d <= 512:
            tm = 512
        else:
            tm = 256
    sub = 16                        # sublane multiple safe for f32 and bf16
    if n_rows > sub:                # encourage >= 2 grid steps (megacore)
        tm = min(tm, _round_up(pl.cdiv(n_rows, 2), sub))
    tm = min(tm, _round_up(n_rows, sub))
    return max(tm, sub)


def _vmem_budget_bytes(tm, d, in_bytes, out_bytes, w_bytes):
    d2, d3 = 2 * d, 3 * d
    weights = (2 * d2 * d3 + 2 * d * d2) * w_bytes + d3 * 4      # resident
    io = 2 * (2 * tm * d2 * in_bytes) + 2 * (tm * d2 * out_bytes)  # 2x buffered
    inter = 2 * tm * d3 * 4 + 2 * tm * d2 * 4                    # f32 temps
    total = int((weights + io + inter) * 1.4) + (2 << 20)        # headroom
    return max(total, 32 << 20)


# -----------------------------------------------------------------------------
# Wrapper
# -----------------------------------------------------------------------------
def filter_gate_apply(h, m, packed, *, tm=None, out_dtype=None,
                      vmem_limit_bytes=None):
    """h, m: (B, T, 2D). Returns (B, T, 2D) in `out_dtype` (default h.dtype)."""
    B, T, f2 = h.shape
    d = packed["wh"].shape[0] // 2
    assert f2 == 2 * d
    out_dtype = h.dtype if out_dtype is None else out_dtype

    n = B * T
    tm_eff = _choose_tm(n, d, tm)
    grid = (pl.cdiv(n, tm_eff),)        # ragged tail -> masked last tile

    h2 = h.reshape(n, f2)               # no cast, no pad in the wrapper
    m2 = m.reshape(n, f2)

    row_spec = pl.BlockSpec((tm_eff, f2), lambda i: (i, 0))
    # Weights: constant index_map -> kept resident in VMEM across grid steps.
    full = lambda a: pl.BlockSpec(a.shape, lambda i, _nd=a.ndim: (0,) * _nd)

    if vmem_limit_bytes is None:
        vmem_limit_bytes = _vmem_budget_bytes(
            tm_eff, d,
            in_bytes=jnp.dtype(h.dtype).itemsize,
            out_bytes=jnp.dtype(out_dtype).itemsize,
            w_bytes=jnp.dtype(packed["wh"].dtype).itemsize)

    out = pl.pallas_call(
        functools.partial(_filter_gate_kernel, d=d),
        out_shape=jax.ShapeDtypeStruct((n, f2), out_dtype),
        grid_spec=pltpu.PrefetchScalarGridSpec(
            num_scalar_prefetch=0,
            grid=grid,
            in_specs=[
                row_spec, row_spec,
                full(packed["wh"]), full(packed["wm"]), full(packed["bm"]),
                full(packed["wu_a"]), full(packed["wu_b"]),
            ],
            out_specs=row_spec,
        ),
        compiler_params=pltpu.CompilerParams(
            dimension_semantics=("parallel",),
            vmem_limit_bytes=int(vmem_limit_bytes)),
    )(h2, m2, packed["wh"], packed["wm"], packed["bm"],
      packed["wu_a"], packed["wu_b"])

    return out.reshape(B, T, f2)


def filter_gate(h, m, params, *, tm=None, compute_dtype=jnp.bfloat16,
                out_dtype=None, vmem_limit_bytes=None):
    packed = prepare_filter_gate_params(params, compute_dtype)
    return filter_gate_apply(h, m, packed, tm=tm, out_dtype=out_dtype,
                             vmem_limit_bytes=vmem_limit_bytes)


# -----------------------------------------------------------------------------
# Pure-JAX reference mirroring the PyTorch forward
# -----------------------------------------------------------------------------
def filter_gate_ref(h, m, params, compute_dtype=jnp.float32):
    """compute_dtype controls matmul input precision (f32 = exact reference,
    bf16 = same MXU precision as the kernel); accumulation is always f32."""
    w_s_h = params["w_s_h"]
    w_m_s, b_m_s = params["w_m_s"]
    w_m, b_m = params["w_m"]
    w_m_ = params["w_m_"]
    cd = compute_dtype
    dot = lambda a, w: jnp.dot(a.astype(cd), w.T.astype(cd),
                               preferred_element_type=jnp.float32)
    gate_val = jax.nn.sigmoid(
        jnp.concatenate([dot(h, w_s_h), dot(m, w_m_s) + b_m_s], axis=2))
    u = gate_val * jnp.tanh(dot(m, w_m) + b_m)
    return dot(jnp.concatenate([h, u], axis=2), w_m_).astype(h.dtype)


# -----------------------------------------------------------------------------
# Demo / self-check
# -----------------------------------------------------------------------------
if __name__ == "__main__":
    # small shapes: batch=2, seq=8, hidden_dimension D=16  ->  features 2*D=32
    B, T, D = 2, 8, 16

    key = jax.random.PRNGKey(0)
    ks = jax.random.split(key, 8)
    scale = 0.1
    params = {
        "w_s_h": scale * jax.random.normal(ks[0], (D, 2 * D), jnp.float32),
        "w_m_s": (scale * jax.random.normal(ks[1], (D, 2 * D), jnp.float32),
                  scale * jax.random.normal(ks[2], (D,), jnp.float32)),
        "w_m": (scale * jax.random.normal(ks[3], (2 * D, 2 * D), jnp.float32),
                scale * jax.random.normal(ks[4], (2 * D,), jnp.float32)),
        "w_m_": scale * jax.random.normal(ks[5], (2 * D, 4 * D), jnp.float32),
    }

    h = jax.random.normal(ks[6], (B, T, 2 * D), jnp.float32)
    m = jax.random.normal(ks[7], (B, T, 2 * D), jnp.float32)

    packed = prepare_filter_gate_params(params, compute_dtype=jnp.bfloat16)

    # Default path: output in h.dtype (original module semantics).
    out = jax.block_until_ready(filter_gate_apply(h, m, packed))
    # Reduced write-back path: bf16 output (perf feedback #2).
    out_bf16 = jax.block_until_ready(
        filter_gate_apply(h, m, packed, out_dtype=jnp.bfloat16))

    # Reference with matching MXU precision (tight check) ...
    ref_bf16 = jax.block_until_ready(
        filter_gate_ref(h, m, params, compute_dtype=jnp.bfloat16))
    # ... and the exact f32 reference (loose sanity check of bf16 matmuls).
    ref_f32 = jax.block_until_ready(
        filter_gate_ref(h, m, params, compute_dtype=jnp.float32))

    assert out.shape == (B, T, 2 * D) and out.dtype == h.dtype
    assert out_bf16.shape == (B, T, 2 * D) and out_bf16.dtype == jnp.bfloat16
    assert jnp.allclose(out, ref_bf16, atol=5e-3, rtol=5e-3), (
        float(jnp.max(jnp.abs(out - ref_bf16))))
    assert jnp.allclose(out, ref_f32, atol=5e-2, rtol=5e-2), (
        float(jnp.max(jnp.abs(out - ref_f32))))
    assert jnp.allclose(out_bf16.astype(jnp.float32), ref_bf16,
                        atol=2e-2, rtol=2e-2), (
        float(jnp.max(jnp.abs(out_bf16.astype(jnp.float32) - ref_bf16))))
    print("KERNEL_OK")
</pallas_src>

<mosaic_0001>
module attributes {stable_mosaic.version = 11 : i64} {
  func.func @_filter_gate_kernel(%arg0: i32, %arg1: memref<16x32xf32, #tpu.memory_space<vmem>>, %arg2: memref<16x32xf32, #tpu.memory_space<vmem>>, %arg3: memref<32x48xbf16, #tpu.memory_space<vmem>>, %arg4: memref<32x48xbf16, #tpu.memory_space<vmem>>, %arg5: memref<1x48xf32, #tpu.memory_space<vmem>>, %arg6: memref<16x32xbf16, #tpu.memory_space<vmem>>, %arg7: memref<16x32xbf16, #tpu.memory_space<vmem>>, %arg8: memref<16x32xf32, #tpu.memory_space<vmem>>) attributes {dimension_semantics = [#tpu.dimension_semantics<parallel>], iteration_bounds = array<i64: 1>, scalar_prefetch = 0 : i64, scratch_operands = 0 : i64, tpu.core_type = #tpu.core_type<tc>, window_params = [{transform_indices = @transform_0, window_bounds = array<i64: 16, 32>}, {transform_indices = @transform_1, window_bounds = array<i64: 16, 32>}, {pipeline_mode = #tpu.pipeline_mode<synchronous>, transform_indices = @transform_2, window_bounds = array<i64: 32, 48>}, {pipeline_mode = #tpu.pipeline_mode<synchronous>, transform_indices = @transform_3, window_bounds = array<i64: 32, 48>}, {pipeline_mode = #tpu.pipeline_mode<synchronous>, transform_indices = @transform_4, window_bounds = array<i64: 1, 48>}, {pipeline_mode = #tpu.pipeline_mode<synchronous>, transform_indices = @transform_5, window_bounds = array<i64: 16, 32>}, {pipeline_mode = #tpu.pipeline_mode<synchronous>, transform_indices = @transform_6, window_bounds = array<i64: 16, 32>}, {transform_indices = @transform_7, window_bounds = array<i64: 16, 32>}]} {
    %c0 = arith.constant 0 : index
    %c0_0 = arith.constant 0 : index
    %0 = vector.load %arg1[%c0, %c0_0] : memref<16x32xf32, #tpu.memory_space<vmem>>, vector<16x32xf32>
    %1 = arith.truncf %0 : vector<16x32xf32> to vector<16x32xbf16>
    %c0_1 = arith.constant 0 : index
    %c0_2 = arith.constant 0 : index
    %2 = vector.load %arg2[%c0_1, %c0_2] : memref<16x32xf32, #tpu.memory_space<vmem>>, vector<16x32xf32>
    %3 = arith.truncf %2 : vector<16x32xf32> to vector<16x32xbf16>
    %c0_3 = arith.constant 0 : index
    %c0_4 = arith.constant 0 : index
    %4 = vector.load %arg3[%c0_3, %c0_4] : memref<32x48xbf16, #tpu.memory_space<vmem>>, vector<32x48xbf16>
    %cst = arith.constant dense<0.000000e+00> : vector<16x48xf32>
    %5 = tpu.matmul %1, %4, %cst {dimension_numbers = #tpu.dot_dimension_numbers<[1], [0], [0], [1], [0, 0, 1, 1], [], []>} : vector<16x32xbf16>, vector<32x48xbf16>, vector<16x48xf32> -> vector<16x48xf32>
    %c0_5 = arith.constant 0 : index
    %c0_6 = arith.constant 0 : index
    %6 = vector.load %arg4[%c0_5, %c0_6] : memref<32x48xbf16, #tpu.memory_space<vmem>>, vector<32x48xbf16>
    %cst_7 = arith.constant dense<0.000000e+00> : vector<16x48xf32>
    %7 = tpu.matmul %3, %6, %cst_7 {dimension_numbers = #tpu.dot_dimension_numbers<[1], [0], [0], [1], [0, 0, 1, 1], [], []>} : vector<16x32xbf16>, vector<32x48xbf16>, vector<16x48xf32> -> vector<16x48xf32>
    %c0_8 = arith.constant 0 : index
    %c0_9 = arith.constant 0 : index
    %8 = vector.load %arg5[%c0_8, %c0_9] : memref<1x48xf32, #tpu.memory_space<vmem>>, vector<1x48xf32>
    %9 = vector.broadcast %8 : vector<1x48xf32> to vector<16x48xf32>
    %10 = arith.addf %7, %9 : vector<16x48xf32>
    %11 = vector.extract_strided_slice %5 {offsets = [0, 0], sizes = [16, 32], strides = [1, 1]} : vector<16x48xf32> to vector<16x32xf32>
    %12 = vector.extract_strided_slice %5 {offsets = [0, 32], sizes = [16, 16], strides = [1, 1]} : vector<16x48xf32> to vector<16x16xf32>
    %13 = arith.negf %12 : vector<16x16xf32>
    %14 = math.exp %13 : vector<16x16xf32>
    %cst_10 = arith.constant 1.000000e+00 : f32
    %15 = vector.broadcast %cst_10 : f32 to vector<16x16xf32>
    %16 = arith.addf %15, %14 : vector<16x16xf32>
    %17 = arith.divf %15, %16 : vector<16x16xf32>
    %18 = vector.extract_strided_slice %10 {offsets = [0, 0], sizes = [16, 16], strides = [1, 1]} : vector<16x48xf32> to vector<16x16xf32>
    %19 = math.tanh %18 : vector<16x16xf32>
    %20 = arith.mulf %17, %19 : vector<16x16xf32>
    %21 = arith.truncf %20 : vector<16x16xf32> to vector<16x16xbf16>
    %22 = vector.extract_strided_slice %10 {offsets = [0, 32], sizes = [16, 16], strides = [1, 1]} : vector<16x48xf32> to vector<16x16xf32>
    %23 = arith.negf %22 : vector<16x16xf32>
    %24 = math.exp %23 : vector<16x16xf32>
    %cst_11 = arith.constant 1.000000e+00 : f32
    %25 = vector.broadcast %cst_11 : f32 to vector<16x16xf32>
    %26 = arith.addf %25, %24 : vector<16x16xf32>
    %27 = arith.divf %25, %26 : vector<16x16xf32>
    %28 = vector.extract_strided_slice %10 {offsets = [0, 16], sizes = [16, 16], strides = [1, 1]} : vector<16x48xf32> to vector<16x16xf32>
    %29 = math.tanh %28 : vector<16x16xf32>
    %30 = arith.mulf %27, %29 : vector<16x16xf32>
    %31 = arith.truncf %30 : vector<16x16xf32> to vector<16x16xbf16>
    %c0_12 = arith.constant 0 : index
    %c0_13 = arith.constant 0 : index
    %32 = vector.load %arg6[%c0_12, %c0_13] : memref<16x32xbf16, #tpu.memory_space<vmem>>, vector<16x32xbf16>
    %cst_14 = arith.constant dense<0.000000e+00> : vector<16x32xf32>
    %33 = tpu.matmul %21, %32, %cst_14 {dimension_numbers = #tpu.dot_dimension_numbers<[1], [0], [0], [1], [0, 0, 1, 1], [], []>} : vector<16x16xbf16>, vector<16x32xbf16>, vector<16x32xf32> -> vector<16x32xf32>
    %34 = arith.addf %11, %33 : vector<16x32xf32>
    %c0_15 = arith.constant 0 : index
    %c0_16 = arith.constant 0 : index
    %35 = vector.load %arg7[%c0_15, %c0_16] : memref<16x32xbf16, #tpu.memory_space<vmem>>, vector<16x32xbf16>
    %cst_17 = arith.constant dense<0.000000e+00> : vector<16x32xf32>
    %36 = tpu.matmul %31, %35, %cst_17 {dimension_numbers = #tpu.dot_dimension_numbers<[1], [0], [0], [1], [0, 0, 1, 1], [], []>} : vector<16x16xbf16>, vector<16x32xbf16>, vector<16x32xf32> -> vector<16x32xf32>
    %37 = arith.addf %34, %36 : vector<16x32xf32>
    %c0_18 = arith.constant 0 : index
    %c0_19 = arith.constant 0 : index
    %38 = vector.load %arg8[%c0_18, %c0_19] : memref<16x32xf32, #tpu.memory_space<vmem>>, vector<16x32xf32>
    tpu.vector_store %arg8[%c0_18, %c0_19], %37 {strides = array<i32>} : memref<16x32xf32, #tpu.memory_space<vmem>>, vector<16x32xf32>,
    return
  }
  func.func @transform_0(%arg0: i32) -> (i32, i32) {
    %c0_i32 = arith.constant 0 : i32
    %c0_i32_0 = arith.constant 0 : i32
    return %arg0, %c0_i32 : i32, i32
  }
  func.func @transform_1(%arg0: i32) -> (i32, i32) {
    %c0_i32 = arith.constant 0 : i32
    %c0_i32_0 = arith.constant 0 : i32
    return %arg0, %c0_i32 : i32, i32
  }
  func.func @transform_2(%arg0: i32) -> (i32, i32) {
    %c0_i32 = arith.constant 0 : i32
    %c0_i32_0 = arith.constant 0 : i32
    %c0_i32_1 = arith.constant 0 : i32
    return %c0_i32, %c0_i32_0 : i32, i32
  }
  func.func @transform_3(%arg0: i32) -> (i32, i32) {
    %c0_i32 = arith.constant 0 : i32
    %c0_i32_0 = arith.constant 0 : i32
    %c0_i32_1 = arith.constant 0 : i32
    return %c0_i32, %c0_i32_0 : i32, i32
  }
  func.func @transform_4(%arg0: i32) -> (i32, i32) {
    %c0_i32 = arith.constant 0 : i32
    %c0_i32_0 = arith.constant 0 : i32
    %c0_i32_1 = arith.constant 0 : i32
    return %c0_i32, %c0_i32_0 : i32, i32
  }
  func.func @transform_5(%arg0: i32) -> (i32, i32) {
    %c0_i32 = arith.constant 0 : i32
    %c0_i32_0 = arith.constant 0 : i32
    %c0_i32_1 = arith.constant 0 : i32
    return %c0_i32, %c0_i32_0 : i32, i32
  }
  func.func @transform_6(%arg0: i32) -> (i32, i32) {
    %c0_i32 = arith.constant 0 : i32
    %c0_i32_0 = arith.constant 0 : i32
    %c0_i32_1 = arith.constant 0 : i32
    return %c0_i32, %c0_i32_0 : i32, i32
  }
  func.func @transform_7(%arg0: i32) -> (i32, i32) {
    %c0_i32 = arith.constant 0 : i32
    %c0_i32_0 = arith.constant 0 : i32
    return %arg0, %c0_i32 : i32, i32
  }
}

</mosaic_0001>

<llo_original>
// kernel: tpu_custom_call.1
$region0: #{tpu_custom_call.1}
  #allocation0 [shape = 'u32[]', space=smem, size = 0x4, offset = 0x4, fixed_abs, tag = 'smem constant byte address 0x4 - core index']
  #allocation1 [shape = 'u32[144,128]{1,0:T(1,128)}', space=vmem, size = 0x12000, scoped, tag = 'internal scratch']
  %s0 = inlined_call_operand.hbm [shape: f32[16,32], index: 0, kind: input, shape index: {}]
  %s1 = inlined_call_operand.hbm [shape: f32[16,32], index: 1, kind: input, shape index: {}]
  %s2 = inlined_call_operand.hbm [shape: bf16[32,48], index: 2, kind: input, shape index: {}]
  %s3 = inlined_call_operand.hbm [shape: bf16[32,48], index: 3, kind: input, shape index: {}]
  %s4 = inlined_call_operand.vmem [shape: f32[1,48], index: 4, kind: input, shape index: {}]
  %s5 = inlined_call_operand.vmem [shape: bf16[16,32], index: 5, kind: input, shape index: {}]
  %s6 = inlined_call_operand.vmem [shape: bf16[16,32], index: 6, kind: input, shape index: {}]
  %s7 = inlined_call_operand.hbm [shape: f32[16,32], index: 7, kind: output, shape index: {}]
  %s8 = sld [smem:[#allocation0]]
  $region54: #{tpu_custom_call.1} parent=0
    _
  %s10 = ssub.s32 1, %s8
  %s11 = scalar_select 0, %s10, %s8
  $region1: #{tpu_custom_call.1} parent=0
    #allocation2 [shape = 'u8[8192]{0}', space=vmem, size = 0x2000, scoped, tag = 'input window, operand 0, single buffered']
    #allocation3 [shape = 's32[1]{0}', space=sflag, size = 0x4, scoped, tag = 'scoped memory for tpu_custom_call.1']
    #allocation4 [shape = 's32[1]{0}', space=sflag, size = 0x4, scoped, tag = 'scoped memory for tpu_custom_call.1']
    #allocation5 [shape = 'u8[8192]{0}', space=vmem, size = 0x2000, scoped, tag = 'input window, operand 1, single buffered']
    #allocation6 [shape = 's32[1]{0}', space=sflag, size = 0x4, scoped, tag = 'scoped memory for tpu_custom_call.1']
    #allocation7 [shape = 'u8[8192]{0}', space=vmem, size = 0x2000, scoped, tag = 'input window, operand 2, single buffered']
    #allocation8 [shape = 'u8[8192]{0}', space=vmem, size = 0x2000, scoped, tag = 'input window, operand 3, single buffered']
    #allocation9 [shape = 's32[1]{0}', space=sflag, size = 0x4, scoped, tag = 'scoped memory for tpu_custom_call.1']
    #allocation10 [shape = 'u8[8192]{0}', space=vmem, size = 0x2000, scoped, tag = 'output window, operand 0, single buffered']
    %12 = vsyncpa [#allocation3], 0
    %13 = vsyncpa [#allocation6], 0
    %14 = vsyncpa [#allocation9], 0
    %15 = vsyncpa [#allocation4], 0
    // Predicated region
    $region2: #{tpu_custom_call.1} parent=1 // pred_check
      _
    $region3: #{tpu_custom_call.1} parent=1 // pred_check_branch
      %17 = sbr.rel (0) target = $region5
    $region4: #{tpu_custom_call.1} parent=1 // pred_region
      %s19 = ssub.s32 256, 256
      %20 = vsyncadd [#allocation3], %s19
      %s21 = sshll.u32 [#allocation2], 4
      %s22 = int_to_ptr.vmem [resolvable:$true] %s21
      %27 = dma.hbm_to_vmem [thread:$0]  %s0, 256, %s22, [#allocation3], 128, 128, 8
    $region5: #{tpu_custom_call.1} parent=1 // pred_fallthru
      _
    // Predicated region
    $region6: #{tpu_custom_call.1} parent=1 // pred_check
      _
    $region7: #{tpu_custom_call.1} parent=1 // pred_check_branch
      %29 = sbr.rel (0) target = $region9
    $region8: #{tpu_custom_call.1} parent=1 // pred_region
      %s31 = ssub.s32 256, 256
      %32 = vsyncadd [#allocation6], %s31
      %s33 = sshll.u32 [#allocation5], 4
      %s34 = int_to_ptr.vmem [resolvable:$true] %s33
      %39 = dma.hbm_to_vmem [thread:$0]  %s1, 256, %s34, [#allocation6], 128, 128, 8
    $region9: #{tpu_custom_call.1} parent=1 // pred_fallthru
      _
    // Predicated region
    $region10: #{tpu_custom_call.1} parent=1 // pred_check
      _
    $region11: #{tpu_custom_call.1} parent=1 // pred_check_branch
      %41 = sbr.rel (0) target = $region13
    $region12: #{tpu_custom_call.1} parent=1 // pred_region
      %s43 = ssub.s32 256, 256
      %44 = vsyncadd [#allocation6], %s43
      %s45 = sshll.u32 [#allocation7], 4
      %s46 = int_to_ptr.vmem [resolvable:$true] %s45
      %51 = dma.hbm_to_vmem [thread:$0]  %s2, 256, %s46, [#allocation6], 64, 64, 4
    $region13: #{tpu_custom_call.1} parent=1 // pred_fallthru
      _
    // Predicated region
    $region14: #{tpu_custom_call.1} parent=1 // pred_check
      _
    $region15: #{tpu_custom_call.1} parent=1 // pred_check_branch
      %53 = sbr.rel (0) target = $region17
    $region16: #{tpu_custom_call.1} parent=1 // pred_region
      %s55 = ssub.s32 256, 256
      %56 = vsyncadd [#allocation9], %s55
      %s57 = sshll.u32 [#allocation8], 4
      %s58 = int_to_ptr.vmem [resolvable:$true] %s57
      %63 = dma.hbm_to_vmem [thread:$0]  %s3, 256, %s58, [#allocation9], 64, 64, 4
    $region17: #{tpu_custom_call.1} parent=1 // pred_fallthru
      _
    // Predicated region
    $region18: #{tpu_custom_call.1} parent=1 // pred_check
      _
    $region19: #{tpu_custom_call.1} parent=1 // pred_check_branch
      %65 = sbr.rel (0) target = $region21
    $region20: #{tpu_custom_call.1} parent=1 // pred_region
      _
    $region21: #{tpu_custom_call.1} parent=1 // pred_fallthru
      _
    // Predicated region
    $region22: #{tpu_custom_call.1} parent=1 // pred_check
      _
    $region23: #{tpu_custom_call.1} parent=1 // pred_check_branch
      %67 = sbr.rel (0) target = $region25
    $region24: #{tpu_custom_call.1} parent=1 // pred_region
      _
    $region25: #{tpu_custom_call.1} parent=1 // pred_fallthru
      _
    // Predicated region
    $region26: #{tpu_custom_call.1} parent=1 // pred_check
      _
    $region27: #{tpu_custom_call.1} parent=1 // pred_check_branch
      %69 = sbr.rel (0) target = $region29
    $region28: #{tpu_custom_call.1} parent=1 // pred_region
      _
    $region29: #{tpu_custom_call.1} parent=1 // pred_fallthru
      _
    // Predicated region
    $region30: #{tpu_custom_call.1} parent=1 // pred_check
      _
    $region31: #{tpu_custom_call.1} parent=1 // pred_check_branch
      %71 = sbr.rel (0) target = $region33
    $region32: #{tpu_custom_call.1} parent=1 // pred_region
      %72 = dma.done [#allocation3], 256
    $region33: #{tpu_custom_call.1} parent=1 // pred_fallthru
      _
    // Predicated region
    $region34: #{tpu_custom_call.1} parent=1 // pred_check
      _
    $region35: #{tpu_custom_call.1} parent=1 // pred_check_branch
      %74 = sbr.rel (0) target = $region37
    $region36: #{tpu_custom_call.1} parent=1 // pred_region
      %75 = dma.done [#allocation6], 256
    $region37: #{tpu_custom_call.1} parent=1 // pred_fallthru
      _
    // Predicated region
    $region38: #{tpu_custom_call.1} parent=1 // pred_check
      _
    $region39: #{tpu_custom_call.1} parent=1 // pred_check_branch
      %77 = sbr.rel (0) target = $region41
    $region40: #{tpu_custom_call.1} parent=1 // pred_region
      %78 = dma.done [#allocation6], 256
    $region41: #{tpu_custom_call.1} parent=1 // pred_fallthru
      _
    // Predicated region
    $region42: #{tpu_custom_call.1} parent=1 // pred_check
      _
    $region43: #{tpu_custom_call.1} parent=1 // pred_check_branch
      %80 = sbr.rel (0) target = $region45
    $region44: #{tpu_custom_call.1} parent=1 // pred_region
      %81 = dma.done [#allocation9], 256
    $region45: #{tpu_custom_call.1} parent=1 // pred_fallthru
      _
    %v83 = vld [vmem:[#allocation2] sm:$0xff]
    %v84 = vld [vmem:[#allocation2 + $0x8] sm:$0xff]
    %v85 = vpack.c.bf16 %v84, %v83
    %v86 = vld [vmem:[#allocation5] sm:$0xff]
    %v87 = vld [vmem:[#allocation5 + $0x8] sm:$0xff]
    %v88 = vpack.c.bf16 %v87, %v86
    %v89 = vld [vmem:[#allocation7] sm:$0xf]
    %v90 = vld [vmem:[#allocation7 + $0x4] sm:$0xf]
    %v91 = vld [vmem:[#allocation7 + $0x8] sm:$0xf]
    %v92 = vld [vmem:[#allocation7 + $0xc] sm:$0xf]
    %v97 = vunpack.c.l.b16 %v89
    %v98 = vunpack.c.l.b16 %v90
    %v99 = vunpack.c.l.b16 %v91
    %v100 = vunpack.c.l.b16 %v92
    %v101 = vpack.c.b16 %v98, %v97
    %v102 = vpack.c.b16 %v100, %v99
    %vm105 = vcmask 261120
    %v107 = vsel %vm105, %v85, 0
    %109 = vmatprep.subr.bf16.mxu0 0
    %110 = vmatpush1.bf16.msra.mxu0 %v101
    %111 = vmatprep.subr.bf16.mxu0 0
    %112 = vmatpush1.bf16.msra.mxu0 %v102
    %113 = vmatprep.subr.bf16.mxu0 0
    %114 = vmatpush1.bf16.msra.mxu0 0
    %115 = vmatprep.subr.bf16.mxu0 0
    %116 = vmatpush1.bf16.msra.mxu0 0
    %117 = vmatprep.subr.bf16.mxu0 0
    %118 = vmatpush1.bf16.msra.mxu0 0
    %119 = vmatprep.subr.bf16.mxu0 0
    %120 = vmatpush1.bf16.msra.mxu0 0
    %121 = vmatprep.subr.bf16.mxu0 0
    %122 = vmatpush1.bf16.msra.mxu0 0
    %123 = vmatprep.subr.bf16.mxu0 0
    %124 = vmatpush1.bf16.msra.mxu0 0
    %125 = vmatprep.subr.bf16.mxu0 0
    %126 = vmatpush1.bf16.msra.mxu0 0
    %127 = vmatprep.subr.bf16.mxu0 0
    %128 = vmatpush1.bf16.msra.mxu0 0
    %129 = vmatprep.subr.bf16.mxu0 0
    %130 = vmatpush1.bf16.msra.mxu0 0
    %131 = vmatprep.subr.bf16.mxu0 0
    %132 = vmatpush1.bf16.msra.mxu0 0
    %133 = vmatprep.subr.bf16.mxu0 0
    %134 = vmatpush1.bf16.msra.mxu0 0
    %135 = vmatprep.subr.bf16.mxu0 0
    %136 = vmatpush1.bf16.msra.mxu0 0
    %137 = vmatprep.subr.bf16.mxu0 0
    %138 = vmatpush1.bf16.msra.mxu0 0
    %139 = vmatprep.subr.bf16.mxu0 0
    %140 = vmatpush1.bf16.msra.mxu0 0
    %141 = vmatprep.mubr.bf16.mxu0 0
    %142 = vmatmul.mubr.bf16.gmra.mrb[0].mxu0 %v107
    %v143 = vpop.f32.mrb[0].mxu0
    %v144 = vadd.f32 0.0, %v143
    %v145 = vpop.f32.mrb[0].mxu0
    %v146 = vpop.f32.mrb[0].mxu0
    %v147 = vadd.f32 0.0, %v146
    %v148 = vpop.f32.mrb[0].mxu0
    %149 = vdwg.mxu0
    %v150 = vld [vmem:[#allocation8] sm:$0xf]
    %v151 = vld [vmem:[#allocation8 + $0x4] sm:$0xf]
    %v152 = vld [vmem:[#allocation8 + $0x8] sm:$0xf]
    %v153 = vld [vmem:[#allocation8 + $0xc] sm:$0xf]
    %v154 = vld [vmem:[%s4] sm:$0x1]
    %v156 = vlaneseq
    %v157 = vshrl.u32 %v156, 7
    %v158 = vsub.s32 0, %v157
    %v159 = vrot.slane %v154, %v158
    %v165 = vunpack.c.l.b16 %v150
    %v166 = vunpack.c.l.b16 %v151
    %v167 = vunpack.c.l.b16 %v152
    %v168 = vunpack.c.l.b16 %v153
    %v169 = vpack.c.b16 %v166, %v165
    %v170 = vpack.c.b16 %v168, %v167
    %v174 = vsel %vm105, %v88, 0
    %176 = vmatprep.subr.bf16.mxu0 0
    %177 = vmatpush1.bf16.msra.mxu0 %v169
    %178 = vmatprep.subr.bf16.mxu0 0
    %179 = vmatpush1.bf16.msra.mxu0 %v170
    %180 = vmatprep.subr.bf16.mxu0 0
    %181 = vmatpush1.bf16.msra.mxu0 0
    %182 = vmatprep.subr.bf16.mxu0 0
    %183 = vmatpush1.bf16.msra.mxu0 0
    %184 = vmatprep.subr.bf16.mxu0 0
    %185 = vmatpush1.bf16.msra.mxu0 0
    %186 = vmatprep.subr.bf16.mxu0 0
    %187 = vmatpush1.bf16.msra.mxu0 0
    %188 = vmatprep.subr.bf16.mxu0 0
    %189 = vmatpush1.bf16.msra.mxu0 0
    %190 = vmatprep.subr.bf16.mxu0 0
    %191 = vmatpush1.bf16.msra.mxu0 0
    %192 = vmatprep.subr.bf16.mxu0 0
    %193 = vmatpush1.bf16.msra.mxu0 0
    %194 = vmatprep.subr.bf16.mxu0 0
    %195 = vmatpush1.bf16.msra.mxu0 0
    %196 = vmatprep.subr.bf16.mxu0 0
    %197 = vmatpush1.bf16.msra.mxu0 0
    %198 = vmatprep.subr.bf16.mxu0 0
    %199 = vmatpush1.bf16.msra.mxu0 0
    %200 = vmatprep.subr.bf16.mxu0 0
    %201 = vmatpush1.bf16.msra.mxu0 0
    %202 = vmatprep.subr.bf16.mxu0 0
    %203 = vmatpush1.bf16.msra.mxu0 0
    %204 = vmatprep.subr.bf16.mxu0 0
    %205 = vmatpush1.bf16.msra.mxu0 0
    %206 = vmatprep.subr.bf16.mxu0 0
    %207 = vmatpush1.bf16.msra.mxu0 0
    %208 = vmatprep.mubr.bf16.mxu0 0
    %209 = vmatmul.mubr.bf16.gmra.mrb[0].mxu0 %v174
    %v210 = vpop.f32.mrb[0].mxu0
    %v211 = vadd.f32 %v159, %v210
    %v212 = vpop.f32.mrb[0].mxu0
    %v213 = vpop.f32.mrb[0].mxu0
    %v214 = vadd.f32 %v159, %v213
    %v215 = vpop.f32.mrb[0].mxu0
    %216 = vdwg.mxu0
    %v217 = vxor.u32 %v144, 2147483648
    %v218 = vxor.u32 %v147, 2147483648
    %v219 = vmul.f32 %v217, 1.442695
    %v220 = vpow.pop %v219
    %v221 = vmul.f32 %v218, 1.442695
    %v222 = vpow.pop %v221
    %v223 = vadd.f32 %v220, 1.0
    %v224 = vadd.f32 %v222, 1.0
    %v225 = vrcp.pop %v223
    %v226 = vmul.f32 1.0, %v225
    %v227 = vrcp.pop %v224
    %v228 = vmul.f32 1.0, %v227
    %v229 = vtanh.pop %v211
    %v230 = vtanh.pop %v214
    %233 = vrot.lane.b32.xlu0 %v229, 32
    %v234 = vpop.permute.xlu0 %233
    %235 = vrot.lane.b32.xlu0 %v230, 32
    %v236 = vpop.permute.xlu0 %235
    %v239 = vmul.f32 %v226, %v234
    %v240 = vmul.f32 %v228, %v236
    %v241 = vpack.c.bf16 %v240, %v239
    %v242 = vxor.u32 %v211, 2147483648
    %v243 = vxor.u32 %v214, 2147483648
    %v244 = vmul.f32 %v242, 1.442695
    %v245 = vpow.pop %v244
    %v246 = vmul.f32 %v243, 1.442695
    %v247 = vpow.pop %v246
    %v248 = vadd.f32 %v245, 1.0
    %v249 = vadd.f32 %v247, 1.0
    %v250 = vrcp.pop %v248
    %v251 = vmul.f32 1.0, %v250
    %v252 = vrcp.pop %v249
    %v253 = vmul.f32 1.0, %v252
    %254 = vrot.lane.b32.xlu0 %v229, 16
    %v255 = vpop.permute.xlu0 %254
    %256 = vrot.lane.b32.xlu0 %v230, 16
    %v257 = vpop.permute.xlu0 %256
    %v260 = vmul.f32 %v251, %v255
    %v261 = vmul.f32 %v253, %v257
    %v262 = vpack.c.bf16 %v261, %v260
    %v263 = vld [vmem:[%s5] sm:$0xf]
    %v264 = vld [vmem:[%s5 + $0x4] sm:$0xf]
    %266 = vrot.lane.b32.xlu0 %v241, 96
    %v267 = vpop.permute.xlu0 %266
    %v270 = vunpack.c.l.b16 %v263
    %v271 = vunpack.c.l.b16 %v264
    %v272 = vpack.c.b16 %v271, %v270
    %vm274 = vcmask 130048
    %v276 = vsel %vm274, %v267, 0
    %278 = vmatprep.subr.bf16.mxu0 0
    %279 = vmatpush1.bf16.msra.mxu0 %v272
    %280 = vmatprep.subr.bf16.mxu0 0
    %281 = vmatpush1.bf16.msra.mxu0 0
    %282 = vmatprep.subr.bf16.mxu0 0
    %283 = vmatpush1.bf16.msra.mxu0 0
    %284 = vmatprep.subr.bf16.mxu0 0
    %285 = vmatpush1.bf16.msra.mxu0 0
    %286 = vmatprep.subr.bf16.mxu0 0
    %287 = vmatpush1.bf16.msra.mxu0 0
    %288 = vmatprep.subr.bf16.mxu0 0
    %289 = vmatpush1.bf16.msra.mxu0 0
    %290 = vmatprep.subr.bf16.mxu0 0
    %291 = vmatpush1.bf16.msra.mxu0 0
    %292 = vmatprep.subr.bf16.mxu0 0
    %293 = vmatpush1.bf16.msra.mxu0 0
    %294 = vmatprep.subr.bf16.mxu0 0
    %295 = vmatpush1.bf16.msra.mxu0 0
    %296 = vmatprep.subr.bf16.mxu0 0
    %297 = vmatpush1.bf16.msra.mxu0 0
    %298 = vmatprep.subr.bf16.mxu0 0
    %299 = vmatpush1.bf16.msra.mxu0 0
    %300 = vmatprep.subr.bf16.mxu0 0
    %301 = vmatpush1.bf16.msra.mxu0 0
    %302 = vmatprep.subr.bf16.mxu0 0
    %303 = vmatpush1.bf16.msra.mxu0 0
    %304 = vmatprep.subr.bf16.mxu0 0
    %305 = vmatpush1.bf16.msra.mxu0 0
    %306 = vmatprep.subr.bf16.mxu0 0
    %307 = vmatpush1.bf16.msra.mxu0 0
    %308 = vmatprep.subr.bf16.mxu0 0
    %309 = vmatpush1.bf16.msra.mxu0 0
    %310 = vmatprep.mubr.bf16.mxu0 0
    %311 = vmatmul.mubr.bf16.gmra.mrb[0].mxu0 %v276
    %v312 = vpop.f32.mrb[0].mxu0
    %v313 = vadd.f32 0.0, %v312
    %v314 = vpop.f32.mrb[0].mxu0
    %v315 = vpop.f32.mrb[0].mxu0
    %v316 = vadd.f32 0.0, %v315
    %v317 = vpop.f32.mrb[0].mxu0
    %318 = vdwg.mxu0
    %v319 = vadd.f32 %v144, %v313
    %v320 = vadd.f32 %v147, %v316
    %v321 = vld [vmem:[%s6] sm:$0xf]
    %v322 = vld [vmem:[%s6 + $0x4] sm:$0xf]
    %324 = vrot.lane.b32.xlu0 %v262, 96
    %v325 = vpop.permute.xlu0 %324
    %v328 = vunpack.c.l.b16 %v321
    %v329 = vunpack.c.l.b16 %v322
    %v330 = vpack.c.b16 %v329, %v328
    %v333 = vsel %vm274, %v325, 0
    %335 = vmatprep.subr.bf16.mxu0 0
    %336 = vmatpush1.bf16.msra.mxu0 %v330
    %337 = vmatprep.subr.bf16.mxu0 0
    %338 = vmatpush1.bf16.msra.mxu0 0
    %339 = vmatprep.subr.bf16.mxu0 0
    %340 = vmatpush1.bf16.msra.mxu0 0
    %341 = vmatprep.subr.bf16.mxu0 0
    %342 = vmatpush1.bf16.msra.mxu0 0
    %343 = vmatprep.subr.bf16.mxu0 0
    %344 = vmatpush1.bf16.msra.mxu0 0
    %345 = vmatprep.subr.bf16.mxu0 0
    %346 = vmatpush1.bf16.msra.mxu0 0
    %347 = vmatprep.subr.bf16.mxu0 0
    %348 = vmatpush1.bf16.msra.mxu0 0
    %349 = vmatprep.subr.bf16.mxu0 0
    %350 = vmatpush1.bf16.msra.mxu0 0
    %351 = vmatprep.subr.bf16.mxu0 0
    %352 = vmatpush1.bf16.msra.mxu0 0
    %353 = vmatprep.subr.bf16.mxu0 0
    %354 = vmatpush1.bf16.msra.mxu0 0
    %355 = vmatprep.subr.bf16.mxu0 0
    %356 = vmatpush1.bf16.msra.mxu0 0
    %357 = vmatprep.subr.bf16.mxu0 0
    %358 = vmatpush1.bf16.msra.mxu0 0
    %359 = vmatprep.subr.bf16.mxu0 0
    %360 = vmatpush1.bf16.msra.mxu0 0
    %361 = vmatprep.subr.bf16.mxu0 0
    %362 = vmatpush1.bf16.msra.mxu0 0
    %363 = vmatprep.subr.bf16.mxu0 0
    %364 = vmatpush1.bf16.msra.mxu0 0
    %365 = vmatprep.subr.bf16.mxu0 0
    %366 = vmatpush1.bf16.msra.mxu0 0
    %367 = vmatprep.mubr.bf16.mxu0 0
    %368 = vmatmul.mubr.bf16.gmra.mrb[0].mxu0 %v333
    %v369 = vpop.f32.mrb[0].mxu0
    %v370 = vadd.f32 0.0, %v369
    %v371 = vpop.f32.mrb[0].mxu0
    %v372 = vpop.f32.mrb[0].mxu0
    %v373 = vadd.f32 0.0, %v372
    %v374 = vpop.f32.mrb[0].mxu0
    %375 = vdwg.mxu0
    %v376 = vadd.f32 %v319, %v370
    %v377 = vadd.f32 %v320, %v373
    %378 = vst.msk [vmem:[#allocation10] sm:$0xff] %vm105, %v376
    %379 = vst.msk [vmem:[#allocation10 + $0x8] sm:$0xff] %vm105, %v377
    // Predicated region
    $region46: #{tpu_custom_call.1} parent=1 // pred_check
      _
    $region47: #{tpu_custom_call.1} parent=1 // pred_check_branch
      %381 = sbr.rel (0) target = $region49
    $region48: #{tpu_custom_call.1} parent=1 // pred_region
      %s383 = ssub.s32 256, 256
      %384 = vsyncadd [#allocation4], %s383
      %s385 = sshll.u32 [#allocation10], 4
      %s386 = int_to_ptr.vmem [resolvable:$true] %s385
      %391 = dma.vmem_to_hbm [thread:$0]  %s386, 256, %s7, [#allocation4], 128, 128, 8
    $region49: #{tpu_custom_call.1} parent=1 // pred_fallthru
      _
    // Predicated region
    $region50: #{tpu_custom_call.1} parent=1 // pred_check
      _
    $region51: #{tpu_custom_call.1} parent=1 // pred_check_branch
      %393 = sbr.rel (0) target = $region53
    $region52: #{tpu_custom_call.1} parent=1 // pred_region
      %394 = dma.done [#allocation4], 256
    $region53: #{tpu_custom_call.1} parent=1 // pred_fallthru
      _
    %395 = vsyncpa [#allocation3], 1
    %396 = vsyncpa [#allocation6], 1
    %397 = vsyncpa [#allocation9], 1
    %398 = vsyncpa [#allocation4], 1

</llo_original>
